<compile_context>
chip_gen: v7x
topology: tpu7x:2x2x1
jax: 0.10.0
libtpu: 0.0.40
codegen_flags: <defaults>
</compile_context>

<pallas_src>
import functools

import jax
import jax.numpy as jnp
import numpy as np
from jax.experimental import pallas as pl
from jax.experimental.pallas import tpu as pltpu

LANE = 128


def _round_up(x, m):
    return ((x + m - 1) // m) * m


def _choose_batch_block(B, block_b, num_parallel_blocks):
    """Pick the batch rows per grid step.

    Single-TC chips (v5e/v6e): whole batch in one step whenever it fits.
    v7x: pass num_parallel_blocks=2 so the 'parallel' grid axis shards one big
    block onto each TensorCore.  Never split finer than needed.
    """
    bb = -(-B // max(num_parallel_blocks, 1))      # cdiv
    bb = min(bb, block_b)
    if bb >= B:
        return B                                   # full-extent block, no pad needed
    return _round_up(bb, 16)                       # sublane-aligned (bf16 packs rows in pairs)


# --------------------------------------------------------------------------- #
# Kernel: one batch block (bb rows) through the 3-layer SlimFC MLP.
# bf16 MXU inputs + f32 accumulation; bias add / ReLU in f32 (v5e-safe VPU path).
# --------------------------------------------------------------------------- #
def mlp_q_kernel(x_ref, w1_ref, b1_ref, w2_ref, b2_ref, w3_ref, b3_ref, out_ref):
    f32, bf16 = jnp.float32, jnp.bfloat16

    x = x_ref[...]                                   # (bb, d_in)
    if x.dtype != bf16:                              # trace-time branch only
        x = x.astype(bf16)

    # Layer 1: Linear(d_in -> h1) + ReLU.
    h = jnp.dot(x, w1_ref[...], preferred_element_type=f32)
    h = jnp.maximum(h + b1_ref[...], 0.0)            # (bb, h1) f32

    # Layer 2: Linear(h1 -> h2) + ReLU.
    h = jnp.dot(h.astype(bf16), w2_ref[...], preferred_element_type=f32)
    h = jnp.maximum(h + b2_ref[...], 0.0)            # (bb, h2) f32

    # Output layer: Linear(h2 -> d_out_pad), no activation.  Columns beyond
    # num_outputs carry zero weights/bias -> lane-dense unmasked store.
    y = jnp.dot(h.astype(bf16), w3_ref[...], preferred_element_type=f32) + b3_ref[...]
    out_ref[...] = y.astype(out_ref.dtype)           # (bb, d_out_pad)


# --------------------------------------------------------------------------- #
# Wrapper: forward(input_dict['obs'], state) -> (q_values, state)
# --------------------------------------------------------------------------- #
def mysac_lazy_q_forward(obs, state, params, *, num_outputs, block_b=1024,
                         num_parallel_blocks=1, out_dtype=jnp.bfloat16):
    B, d_in = obs.shape
    w1, b1 = params["w1"], params["b1"]
    w2, b2 = params["w2"], params["b2"]
    w3, b3 = params["w3"], params["b3"]
    d_out_pad = w3.shape[1]

    bb = _choose_batch_block(B, block_b, num_parallel_blocks)
    grid = (pl.cdiv(B, bb),)

    def const_spec(a):                               # resident weights/biases
        nd = a.ndim
        return pl.BlockSpec(a.shape, lambda i, _nd=nd: (0,) * _nd)

    out_padded = pl.pallas_call(
        mlp_q_kernel,
        out_shape=jax.ShapeDtypeStruct((B, d_out_pad), out_dtype),
        grid_spec=pltpu.PrefetchScalarGridSpec(
            num_scalar_prefetch=0,
            grid=grid,
            in_specs=[
                pl.BlockSpec((bb, d_in), lambda i: (i, 0)),   # obs rows
                const_spec(w1), const_spec(b1),
                const_spec(w2), const_spec(b2),
                const_spec(w3), const_spec(b3),
            ],
            out_specs=pl.BlockSpec((bb, d_out_pad), lambda i: (i, 0)),
        ),
        compiler_params=pltpu.CompilerParams(
            dimension_semantics=("parallel",)),
    )(obs, w1, b1, w2, b2, w3, b3)

    # Layout plumbing only: drop the zero-padded lanes.  Done inside the jitted
    # forward so it fuses with the consumer (no standalone slice launch).
    return out_padded[:, :num_outputs], state


# --------------------------------------------------------------------------- #
# Parameter init (SlimFC defaults: normc_initializer(1.0) weights, zero bias).
# Weights stored bf16 (MXU inputs); biases stay f32 (added post-accumulation).
# --------------------------------------------------------------------------- #
def _normc(key, shape, std=1.0):
    w = jax.random.normal(key, shape, jnp.float32)
    return w * std / jnp.sqrt(jnp.sum(jnp.square(w), axis=0, keepdims=True))


def init_params(key, d_in, hidden_sizes, num_outputs):
    h1, h2 = hidden_sizes
    d_out_pad = _round_up(num_outputs, LANE)
    k1, k2, k3 = jax.random.split(key, 3)

    w3_full = _normc(k3, (h2, num_outputs))
    w3 = jnp.zeros((h2, d_out_pad), jnp.float32).at[:, :num_outputs].set(w3_full)

    return {
        "w1": _normc(k1, (d_in, h1)).astype(jnp.bfloat16),
        "b1": jnp.zeros((1, h1), jnp.float32),
        "w2": _normc(k2, (h1, h2)).astype(jnp.bfloat16),
        "b2": jnp.zeros((1, h2), jnp.float32),
        "w3": w3.astype(jnp.bfloat16),
        "b3": jnp.zeros((1, d_out_pad), jnp.float32),
    }


# Pure-JAX reference with the same precision recipe (bf16 MXU in / f32 accum).
def mlp_reference(obs, params, num_outputs):
    f32, bf16 = jnp.float32, jnp.bfloat16
    h = jnp.dot(obs.astype(bf16), params["w1"], preferred_element_type=f32)
    h = jnp.maximum(h + params["b1"], 0.0)
    h = jnp.dot(h.astype(bf16), params["w2"], preferred_element_type=f32)
    h = jnp.maximum(h + params["b2"], 0.0)
    y = jnp.dot(h.astype(bf16), params["w3"], preferred_element_type=f32) + params["b3"]
    return y[:, :num_outputs]


if __name__ == "__main__":
    B = 256                 # whole batch fits one grid step (single-TC optimal)
    obs_dim = 64            # obs_space.shape[0] (obs ++ action for the SAC Q net)
    hidden_sizes = [256, 256]
    num_outputs = 1         # scalar Q value

    key = jax.random.PRNGKey(0)
    k_obs, k_par = jax.random.split(key)
    obs = jax.random.normal(k_obs, (B, obs_dim), jnp.bfloat16)   # bf16 straight in
    params = init_params(k_par, obs_dim, hidden_sizes, num_outputs)

    state = []
    forward = jax.jit(functools.partial(mysac_lazy_q_forward, num_outputs=num_outputs))
    out, state_out = forward(obs, state, params)
    out = jax.block_until_ready(out)

    ref = mlp_reference(obs, params, num_outputs)
    np.testing.assert_allclose(np.asarray(out, dtype=np.float32),
                               np.asarray(ref, dtype=np.float32),
                               rtol=2e-2, atol=3e-2)
    assert out.shape == (B, num_outputs)
    assert state_out == state
    print("KERNEL_OK")
</pallas_src>

<mosaic_0001>
module attributes {stable_mosaic.version = 11 : i64} {
  func.func @mlp_q_kernel(%arg0: i32, %arg1: memref<256x64xbf16, #tpu.memory_space<vmem>>, %arg2: memref<64x256xbf16, #tpu.memory_space<vmem>>, %arg3: memref<1x256xf32, #tpu.memory_space<vmem>>, %arg4: memref<256x256xbf16, #tpu.memory_space<vmem>>, %arg5: memref<1x256xf32, #tpu.memory_space<vmem>>, %arg6: memref<256x128xbf16, #tpu.memory_space<vmem>>, %arg7: memref<1x128xf32, #tpu.memory_space<vmem>>, %arg8: memref<256x128xbf16, #tpu.memory_space<vmem>>) attributes {dimension_semantics = [#tpu.dimension_semantics<parallel>], iteration_bounds = array<i64: 1>, scalar_prefetch = 0 : i64, scratch_operands = 0 : i64, tpu.core_type = #tpu.core_type<tc>, window_params = [{transform_indices = @transform_0, window_bounds = array<i64: 256, 64>}, {pipeline_mode = #tpu.pipeline_mode<synchronous>, transform_indices = @transform_1, window_bounds = array<i64: 64, 256>}, {pipeline_mode = #tpu.pipeline_mode<synchronous>, transform_indices = @transform_2, window_bounds = array<i64: 1, 256>}, {pipeline_mode = #tpu.pipeline_mode<synchronous>, transform_indices = @transform_3, window_bounds = array<i64: 256, 256>}, {pipeline_mode = #tpu.pipeline_mode<synchronous>, transform_indices = @transform_4, window_bounds = array<i64: 1, 256>}, {pipeline_mode = #tpu.pipeline_mode<synchronous>, transform_indices = @transform_5, window_bounds = array<i64: 256, 128>}, {pipeline_mode = #tpu.pipeline_mode<synchronous>, transform_indices = @transform_6, window_bounds = array<i64: 1, 128>}, {transform_indices = @transform_7, window_bounds = array<i64: 256, 128>}]} {
    %c0 = arith.constant 0 : index
    %c0_0 = arith.constant 0 : index
    %0 = vector.load %arg1[%c0, %c0_0] : memref<256x64xbf16, #tpu.memory_space<vmem>>, vector<256x64xbf16>
    %c0_1 = arith.constant 0 : index
    %c0_2 = arith.constant 0 : index
    %1 = vector.load %arg2[%c0_1, %c0_2] : memref<64x256xbf16, #tpu.memory_space<vmem>>, vector<64x256xbf16>
    %cst = arith.constant dense<0.000000e+00> : vector<256x256xf32>
    %2 = tpu.matmul %0, %1, %cst {dimension_numbers = #tpu.dot_dimension_numbers<[1], [0], [0], [1], [0, 0, 1, 1], [], []>} : vector<256x64xbf16>, vector<64x256xbf16>, vector<256x256xf32> -> vector<256x256xf32>
    %c0_3 = arith.constant 0 : index
    %c0_4 = arith.constant 0 : index
    %3 = vector.load %arg3[%c0_3, %c0_4] : memref<1x256xf32, #tpu.memory_space<vmem>>, vector<1x256xf32>
    %4 = vector.broadcast %3 : vector<1x256xf32> to vector<256x256xf32>
    %5 = arith.addf %2, %4 : vector<256x256xf32>
    %cst_5 = arith.constant 0.000000e+00 : f32
    %6 = vector.broadcast %cst_5 : f32 to vector<256x256xf32>
    %7 = arith.maximumf %5, %6 : vector<256x256xf32>
    %8 = arith.truncf %7 : vector<256x256xf32> to vector<256x256xbf16>
    %c0_6 = arith.constant 0 : index
    %c0_7 = arith.constant 0 : index
    %9 = vector.load %arg4[%c0_6, %c0_7] : memref<256x256xbf16, #tpu.memory_space<vmem>>, vector<256x256xbf16>
    %cst_8 = arith.constant dense<0.000000e+00> : vector<256x256xf32>
    %10 = tpu.matmul %8, %9, %cst_8 {dimension_numbers = #tpu.dot_dimension_numbers<[1], [0], [0], [1], [0, 0, 1, 1], [], []>} : vector<256x256xbf16>, vector<256x256xbf16>, vector<256x256xf32> -> vector<256x256xf32>
    %c0_9 = arith.constant 0 : index
    %c0_10 = arith.constant 0 : index
    %11 = vector.load %arg5[%c0_9, %c0_10] : memref<1x256xf32, #tpu.memory_space<vmem>>, vector<1x256xf32>
    %12 = vector.broadcast %11 : vector<1x256xf32> to vector<256x256xf32>
    %13 = arith.addf %10, %12 : vector<256x256xf32>
    %cst_11 = arith.constant 0.000000e+00 : f32
    %14 = vector.broadcast %cst_11 : f32 to vector<256x256xf32>
    %15 = arith.maximumf %13, %14 : vector<256x256xf32>
    %16 = arith.truncf %15 : vector<256x256xf32> to vector<256x256xbf16>
    %c0_12 = arith.constant 0 : index
    %c0_13 = arith.constant 0 : index
    %17 = vector.load %arg6[%c0_12, %c0_13] : memref<256x128xbf16, #tpu.memory_space<vmem>>, vector<256x128xbf16>
    %cst_14 = arith.constant dense<0.000000e+00> : vector<256x128xf32>
    %18 = tpu.matmul %16, %17, %cst_14 {dimension_numbers = #tpu.dot_dimension_numbers<[1], [0], [0], [1], [0, 0, 1, 1], [], []>} : vector<256x256xbf16>, vector<256x128xbf16>, vector<256x128xf32> -> vector<256x128xf32>
    %c0_15 = arith.constant 0 : index
    %c0_16 = arith.constant 0 : index
    %19 = vector.load %arg7[%c0_15, %c0_16] : memref<1x128xf32, #tpu.memory_space<vmem>>, vector<1x128xf32>
    %20 = vector.broadcast %19 : vector<1x128xf32> to vector<256x128xf32>
    %21 = arith.addf %18, %20 : vector<256x128xf32>
    %22 = arith.truncf %21 : vector<256x128xf32> to vector<256x128xbf16>
    %c0_17 = arith.constant 0 : index
    %c0_18 = arith.constant 0 : index
    %23 = vector.load %arg8[%c0_17, %c0_18] : memref<256x128xbf16, #tpu.memory_space<vmem>>, vector<256x128xbf16>
    tpu.vector_store %arg8[%c0_17, %c0_18], %22 {strides = array<i32>} : memref<256x128xbf16, #tpu.memory_space<vmem>>, vector<256x128xbf16>,
    return
  }
  func.func @transform_0(%arg0: i32) -> (i32, i32) {
    %c0_i32 = arith.constant 0 : i32
    %c0_i32_0 = arith.constant 0 : i32
    return %arg0, %c0_i32 : i32, i32
  }
  func.func @transform_1(%arg0: i32) -> (i32, i32) {
    %c0_i32 = arith.constant 0 : i32
    %c0_i32_0 = arith.constant 0 : i32
    %c0_i32_1 = arith.constant 0 : i32
    return %c0_i32, %c0_i32_0 : i32, i32
  }
  func.func @transform_2(%arg0: i32) -> (i32, i32) {
    %c0_i32 = arith.constant 0 : i32
    %c0_i32_0 = arith.constant 0 : i32
    %c0_i32_1 = arith.constant 0 : i32
    return %c0_i32, %c0_i32_0 : i32, i32
  }
  func.func @transform_3(%arg0: i32) -> (i32, i32) {
    %c0_i32 = arith.constant 0 : i32
    %c0_i32_0 = arith.constant 0 : i32
    %c0_i32_1 = arith.constant 0 : i32
    return %c0_i32, %c0_i32_0 : i32, i32
  }
  func.func @transform_4(%arg0: i32) -> (i32, i32) {
    %c0_i32 = arith.constant 0 : i32
    %c0_i32_0 = arith.constant 0 : i32
    %c0_i32_1 = arith.constant 0 : i32
    return %c0_i32, %c0_i32_0 : i32, i32
  }
  func.func @transform_5(%arg0: i32) -> (i32, i32) {
    %c0_i32 = arith.constant 0 : i32
    %c0_i32_0 = arith.constant 0 : i32
    %c0_i32_1 = arith.constant 0 : i32
    return %c0_i32, %c0_i32_0 : i32, i32
  }
  func.func @transform_6(%arg0: i32) -> (i32, i32) {
    %c0_i32 = arith.constant 0 : i32
    %c0_i32_0 = arith.constant 0 : i32
    %c0_i32_1 = arith.constant 0 : i32
    return %c0_i32, %c0_i32_0 : i32, i32
  }
  func.func @transform_7(%arg0: i32) -> (i32, i32) {
    %c0_i32 = arith.constant 0 : i32
    %c0_i32_0 = arith.constant 0 : i32
    return %arg0, %c0_i32 : i32, i32
  }
}

</mosaic_0001>

<llo_original>
// kernel: mysac_lazy_q_forward.1
$region0: #{mysac_lazy_q_forward.1}
  #allocation0 [shape = 'u32[]', space=smem, size = 0x4, offset = 0x4, fixed_abs, tag = 'smem constant byte address 0x4 - core index']
  #allocation1 [shape = 'u32[144,128]{1,0:T(1,128)}', space=vmem, size = 0x12000, scoped, tag = 'internal scratch']
  %s0 = inlined_call_operand.vmem [shape: bf16[256,64], index: 0, kind: input, shape index: {}]
  %s1 = inlined_call_operand.vmem [shape: bf16[64,256], index: 1, kind: input, shape index: {}]
  %s2 = inlined_call_operand.vmem [shape: f32[1,256], index: 2, kind: input, shape index: {}]
  %s3 = inlined_call_operand.hbm [shape: bf16[256,256], index: 3, kind: input, shape index: {}]
  %s4 = inlined_call_operand.vmem [shape: f32[1,256], index: 4, kind: input, shape index: {}]
  %s5 = inlined_call_operand.vmem [shape: bf16[256,128], index: 5, kind: input, shape index: {}]
  %s6 = inlined_call_operand.vmem [shape: f32[1,128], index: 6, kind: input, shape index: {}]
  %s7 = inlined_call_operand.vmem [shape: bf16[256,128], index: 7, kind: output, shape index: {}]
  %s8 = sld [smem:[#allocation0]]
  $region42: #{mysac_lazy_q_forward.1} parent=0
    _
  %s10 = ssub.s32 1, %s8
  %s11 = scalar_select 0, %s10, %s8
  $region1: #{mysac_lazy_q_forward.1} parent=0
    #allocation2 [shape = 'u8[131072]{0}', space=vmem, size = 0x20000, scoped, tag = 'input window, operand 3, single buffered']
    #allocation3 [shape = 's32[1]{0}', space=sflag, size = 0x4, scoped, tag = 'scoped memory for mysac_lazy_q_forward.1']
    %12 = vsyncpa [#allocation3], 0
    // Predicated region
    $region2: #{mysac_lazy_q_forward.1} parent=1 // pred_check
      _
    $region3: #{mysac_lazy_q_forward.1} parent=1 // pred_check_branch
      %14 = sbr.rel (0) target = $region5
    $region4: #{mysac_lazy_q_forward.1} parent=1 // pred_region
      _
    $region5: #{mysac_lazy_q_forward.1} parent=1 // pred_fallthru
      _
    // Predicated region
    $region6: #{mysac_lazy_q_forward.1} parent=1 // pred_check
      _
    $region7: #{mysac_lazy_q_forward.1} parent=1 // pred_check_branch
      %16 = sbr.rel (0) target = $region9
    $region8: #{mysac_lazy_q_forward.1} parent=1 // pred_region
      _
    $region9: #{mysac_lazy_q_forward.1} parent=1 // pred_fallthru
      _
    // Predicated region
    $region10: #{mysac_lazy_q_forward.1} parent=1 // pred_check
      _
    $region11: #{mysac_lazy_q_forward.1} parent=1 // pred_check_branch
      %18 = sbr.rel (0) target = $region13
    $region12: #{mysac_lazy_q_forward.1} parent=1 // pred_region
      _
    $region13: #{mysac_lazy_q_forward.1} parent=1 // pred_fallthru
      _
    // Predicated region
    $region14: #{mysac_lazy_q_forward.1} parent=1 // pred_check
      _
    $region15: #{mysac_lazy_q_forward.1} parent=1 // pred_check_branch
      %20 = sbr.rel (0) target = $region17
    $region16: #{mysac_lazy_q_forward.1} parent=1 // pred_region
      %s22 = ssub.s32 4096, 4096
      %23 = vsyncadd [#allocation3], %s22
      %s24 = sshll.u32 [#allocation2], 4
      %s25 = int_to_ptr.vmem [resolvable:$true] %s24
      %30 = dma.hbm_to_vmem [thread:$0]  %s3, 4096, %s25, [#allocation3], 128, 128, 8
    $region17: #{mysac_lazy_q_forward.1} parent=1 // pred_fallthru
      _
    // Predicated region
    $region18: #{mysac_lazy_q_forward.1} parent=1 // pred_check
      _
    $region19: #{mysac_lazy_q_forward.1} parent=1 // pred_check_branch
      %32 = sbr.rel (0) target = $region21
    $region20: #{mysac_lazy_q_forward.1} parent=1 // pred_region
      _
    $region21: #{mysac_lazy_q_forward.1} parent=1 // pred_fallthru
      _
    // Predicated region
    $region22: #{mysac_lazy_q_forward.1} parent=1 // pred_check
      _
    $region23: #{mysac_lazy_q_forward.1} parent=1 // pred_check_branch
      %34 = sbr.rel (0) target = $region25
    $region24: #{mysac_lazy_q_forward.1} parent=1 // pred_region
      _
    $region25: #{mysac_lazy_q_forward.1} parent=1 // pred_fallthru
      _
    // Predicated region
    $region26: #{mysac_lazy_q_forward.1} parent=1 // pred_check
      _
    $region27: #{mysac_lazy_q_forward.1} parent=1 // pred_check_branch
      %36 = sbr.rel (0) target = $region29
    $region28: #{mysac_lazy_q_forward.1} parent=1 // pred_region
      _
    $region29: #{mysac_lazy_q_forward.1} parent=1 // pred_fallthru
      _
    // Predicated region
    $region30: #{mysac_lazy_q_forward.1} parent=1 // pred_check
      _
    $region31: #{mysac_lazy_q_forward.1} parent=1 // pred_check_branch
      %38 = sbr.rel (0) target = $region33
    $region32: #{mysac_lazy_q_forward.1} parent=1 // pred_region
      %39 = dma.done [#allocation3], 4096
    $region33: #{mysac_lazy_q_forward.1} parent=1 // pred_fallthru
      _
    %v41 = vld [vmem:[%s0] sm:$0xf]
    %v42 = vld [vmem:[%s0 + $0x4] sm:$0xf]
    %v43 = vld [vmem:[%s0 + $0x8] sm:$0xf]
    %v44 = vld [vmem:[%s0 + $0xc] sm:$0xf]
    %v45 = vld [vmem:[%s0 + $0x10] sm:$0xf]
    %v46 = vld [vmem:[%s0 + $0x14] sm:$0xf]
    %v47 = vld [vmem:[%s0 + $0x18] sm:$0xf]
    %v48 = vld [vmem:[%s0 + $0x1c] sm:$0xf]
    %v49 = vld [vmem:[%s0 + $0x20] sm:$0xf]
    %v50 = vld [vmem:[%s0 + $0x24] sm:$0xf]
    %v51 = vld [vmem:[%s0 + $0x28] sm:$0xf]
    %v52 = vld [vmem:[%s0 + $0x2c] sm:$0xf]
    %v53 = vld [vmem:[%s0 + $0x30] sm:$0xf]
    %v54 = vld [vmem:[%s0 + $0x34] sm:$0xf]
    %v55 = vld [vmem:[%s0 + $0x38] sm:$0xf]
    %v56 = vld [vmem:[%s0 + $0x3c] sm:$0xf]
    %v57 = vld [vmem:[%s0 + $0x40] sm:$0xf]
    %v58 = vld [vmem:[%s0 + $0x44] sm:$0xf]
    %v59 = vld [vmem:[%s0 + $0x48] sm:$0xf]
    %v60 = vld [vmem:[%s0 + $0x4c] sm:$0xf]
    %v61 = vld [vmem:[%s0 + $0x50] sm:$0xf]
    %v62 = vld [vmem:[%s0 + $0x54] sm:$0xf]
    %v63 = vld [vmem:[%s0 + $0x58] sm:$0xf]
    %v64 = vld [vmem:[%s0 + $0x5c] sm:$0xf]
    %v65 = vld [vmem:[%s0 + $0x60] sm:$0xf]
    %v66 = vld [vmem:[%s0 + $0x64] sm:$0xf]
    %v67 = vld [vmem:[%s0 + $0x68] sm:$0xf]
    %v68 = vld [vmem:[%s0 + $0x6c] sm:$0xf]
    %v69 = vld [vmem:[%s0 + $0x70] sm:$0xf]
    %v70 = vld [vmem:[%s0 + $0x74] sm:$0xf]
    %v71 = vld [vmem:[%s0 + $0x78] sm:$0xf]
    %v72 = vld [vmem:[%s0 + $0x7c] sm:$0xf]
    %v73 = vld [vmem:[%s1] sm:$0xff]
    %v74 = vld [vmem:[%s1 + $0x8] sm:$0xff]
    %v75 = vld [vmem:[%s1 + $0x10] sm:$0xff]
    %v76 = vld [vmem:[%s1 + $0x18] sm:$0xff]
    %v77 = vld [vmem:[%s1 + $0x20] sm:$0xff]
    %v78 = vld [vmem:[%s1 + $0x28] sm:$0xff]
    %v79 = vld [vmem:[%s1 + $0x30] sm:$0xff]
    %v80 = vld [vmem:[%s1 + $0x38] sm:$0xff]
    %v81 = vld [vmem:[%s2] sm:$0x3]
    %v83 = vlaneseq
    %v84 = vshrl.u32 %v83, 7
    %v85 = vsub.s32 0, %v84
    %v86 = vrot.slane %v81, %v85
    %v87 = vlaneseq
    %v88 = vshrl.u32 %v87, 7
    %v89 = vsub.s32 1, %v88
    %v90 = vrot.slane %v81, %v89
    %v125 = vunpack.c.l.b16 %v41
    %v126 = vunpack.c.l.b16 %v42
    %v127 = vunpack.c.l.b16 %v43
    %v128 = vunpack.c.l.b16 %v44
    %v129 = vunpack.c.l.b16 %v45
    %v130 = vunpack.c.l.b16 %v46
    %v131 = vunpack.c.l.b16 %v47
    %v132 = vunpack.c.l.b16 %v48
    %v133 = vunpack.c.l.b16 %v49
    %v134 = vunpack.c.l.b16 %v50
    %v135 = vunpack.c.l.b16 %v51
    %v136 = vunpack.c.l.b16 %v52
    %v137 = vunpack.c.l.b16 %v53
    %v138 = vunpack.c.l.b16 %v54
    %v139 = vunpack.c.l.b16 %v55
    %v140 = vunpack.c.l.b16 %v56
    %v141 = vunpack.c.l.b16 %v57
    %v142 = vunpack.c.l.b16 %v58
    %v143 = vunpack.c.l.b16 %v59
    %v144 = vunpack.c.l.b16 %v60
    %v145 = vunpack.c.l.b16 %v61
    %v146 = vunpack.c.l.b16 %v62
    %v147 = vunpack.c.l.b16 %v63
    %v148 = vunpack.c.l.b16 %v64
    %v149 = vunpack.c.l.b16 %v65
    %v150 = vunpack.c.l.b16 %v66
    %v151 = vunpack.c.l.b16 %v67
    %v152 = vunpack.c.l.b16 %v68
    %v153 = vunpack.c.l.b16 %v69
    %v154 = vunpack.c.l.b16 %v70
    %v155 = vunpack.c.l.b16 %v71
    %v156 = vunpack.c.l.b16 %v72
    %v157 = vpack.c.b16 %v126, %v125
    %v158 = vpack.c.b16 %v128, %v127
    %v159 = vpack.c.b16 %v130, %v129
    %v160 = vpack.c.b16 %v132, %v131
    %v161 = vpack.c.b16 %v134, %v133
    %v162 = vpack.c.b16 %v136, %v135
    %v163 = vpack.c.b16 %v138, %v137
    %v164 = vpack.c.b16 %v140, %v139
    %v165 = vpack.c.b16 %v142, %v141
    %v166 = vpack.c.b16 %v144, %v143
    %v167 = vpack.c.b16 %v146, %v145
    %v168 = vpack.c.b16 %v148, %v147
    %v169 = vpack.c.b16 %v150, %v149
    %v170 = vpack.c.b16 %v152, %v151
    %v171 = vpack.c.b16 %v154, %v153
    %v172 = vpack.c.b16 %v156, %v155
    %v181 = vunpack.c.l.b16 %v73
    %v182 = vunpack.c.h.b16 %v73
    %v183 = vunpack.c.l.b16 %v74
    %v184 = vunpack.c.h.b16 %v74
    %v185 = vunpack.c.l.b16 %v75
    %v186 = vunpack.c.h.b16 %v75
    %v187 = vunpack.c.l.b16 %v76
    %v188 = vunpack.c.h.b16 %v76
    %v189 = vunpack.c.l.b16 %v77
    %v190 = vunpack.c.h.b16 %v77
    %v191 = vunpack.c.l.b16 %v78
    %v192 = vunpack.c.h.b16 %v78
    %v193 = vunpack.c.l.b16 %v79
    %v194 = vunpack.c.h.b16 %v79
    %v195 = vunpack.c.l.b16 %v80
    %v196 = vunpack.c.h.b16 %v80
    %v197 = vpack.c.b16 %v183, %v181
    %v198 = vpack.c.b16 %v184, %v182
    %v199 = vpack.c.b16 %v187, %v185
    %v200 = vpack.c.b16 %v188, %v186
    %v201 = vpack.c.b16 %v191, %v189
    %v202 = vpack.c.b16 %v192, %v190
    %v203 = vpack.c.b16 %v195, %v193
    %v204 = vpack.c.b16 %v196, %v194
    %vm213 = vcmask 523264
    %v215 = vsel %vm213, %v157, 0
    %v218 = vsel %vm213, %v158, 0
    %v221 = vsel %vm213, %v159, 0
    %v224 = vsel %vm213, %v160, 0
    %v227 = vsel %vm213, %v161, 0
    %v230 = vsel %vm213, %v162, 0
    %v233 = vsel %vm213, %v163, 0
    %v236 = vsel %vm213, %v164, 0
    %v239 = vsel %vm213, %v165, 0
    %v242 = vsel %vm213, %v166, 0
    %v245 = vsel %vm213, %v167, 0
    %v248 = vsel %vm213, %v168, 0
    %v251 = vsel %vm213, %v169, 0
    %v254 = vsel %vm213, %v170, 0
    %v257 = vsel %vm213, %v171, 0
    %v260 = vsel %vm213, %v172, 0
    %262 = vmatprep.subr.bf16.mxu0 %v198
    %263 = vmatpush1.bf16.msra.mxu0 %v197
    %264 = vmatprep.subr.bf16.mxu0 %v200
    %265 = vmatpush1.bf16.msra.mxu0 %v199
    %266 = vmatprep.subr.bf16.mxu0 %v202
    %267 = vmatpush1.bf16.msra.mxu0 %v201
    %268 = vmatprep.subr.bf16.mxu0 %v204
    %269 = vmatpush1.bf16.msra.mxu0 %v203
    %270 = vmatprep.subr.bf16.mxu0 0
    %271 = vmatpush1.bf16.msra.mxu0 0
    %272 = vmatprep.subr.bf16.mxu0 0
    %273 = vmatpush1.bf16.msra.mxu0 0
    %274 = vmatprep.subr.bf16.mxu0 0
    %275 = vmatpush1.bf16.msra.mxu0 0
    %276 = vmatprep.subr.bf16.mxu0 0
    %277 = vmatpush1.bf16.msra.mxu0 0
    %278 = vmatprep.subr.bf16.mxu0 0
    %279 = vmatpush1.bf16.msra.mxu0 0
    %280 = vmatprep.subr.bf16.mxu0 0
    %281 = vmatpush1.bf16.msra.mxu0 0
    %282 = vmatprep.subr.bf16.mxu0 0
    %283 = vmatpush1.bf16.msra.mxu0 0
    %284 = vmatprep.subr.bf16.mxu0 0
    %285 = vmatpush1.bf16.msra.mxu0 0
    %286 = vmatprep.subr.bf16.mxu0 0
    %287 = vmatpush1.bf16.msra.mxu0 0
    %288 = vmatprep.subr.bf16.mxu0 0
    %289 = vmatpush1.bf16.msra.mxu0 0
    %290 = vmatprep.subr.bf16.mxu0 0
    %291 = vmatpush1.bf16.msra.mxu0 0
    %292 = vmatprep.subr.bf16.mxu0 0
    %293 = vmatpush1.bf16.msra.mxu0 0
    %294 = vmatprep.mubr.bf16.mxu0 0
    %295 = vmatmul.mubr.bf16.gmra.mrb[0].mxu0 %v215
    %v296 = vpop.f32.mrb[0].mxu0
    %v297 = vadd.f32 %v86, %v296
    %v298 = vpop.f32.mrb[0].mxu0
    %v299 = vadd.f32 %v90, %v298
    %v300 = vpop.f32.mrb[0].mxu0
    %v301 = vadd.f32 %v86, %v300
    %v302 = vpop.f32.mrb[0].mxu0
    %v303 = vadd.f32 %v90, %v302
    %304 = vmatprep.mubr.bf16.mxu0 0
    %305 = vmatmul.mubr.bf16.gmra.mrb[0].mxu0 %v218
    %v306 = vpop.f32.mrb[0].mxu0
    %v307 = vadd.f32 %v86, %v306
    %v308 = vpop.f32.mrb[0].mxu0
    %v309 = vadd.f32 %v90, %v308
    %v310 = vpop.f32.mrb[0].mxu0
    %v311 = vadd.f32 %v86, %v310
    %v312 = vpop.f32.mrb[0].mxu0
    %v313 = vadd.f32 %v90, %v312
    %314 = vmatprep.mubr.bf16.mxu0 0
    %315 = vmatmul.mubr.bf16.gmra.mrb[0].mxu0 %v221
    %v316 = vpop.f32.mrb[0].mxu0
    %v317 = vadd.f32 %v86, %v316
    %v318 = vpop.f32.mrb[0].mxu0
    %v319 = vadd.f32 %v90, %v318
    %v320 = vpop.f32.mrb[0].mxu0
    %v321 = vadd.f32 %v86, %v320
    %v322 = vpop.f32.mrb[0].mxu0
    %v323 = vadd.f32 %v90, %v322
    %324 = vmatprep.mubr.bf16.mxu0 0
    %325 = vmatmul.mubr.bf16.gmra.mrb[0].mxu0 %v224
    %v326 = vpop.f32.mrb[0].mxu0
    %v327 = vadd.f32 %v86, %v326
    %v328 = vpop.f32.mrb[0].mxu0
    %v329 = vadd.f32 %v90, %v328
    %v330 = vpop.f32.mrb[0].mxu0
    %v331 = vadd.f32 %v86, %v330
    %v332 = vpop.f32.mrb[0].mxu0
    %v333 = vadd.f32 %v90, %v332
    %334 = vmatprep.mubr.bf16.mxu0 0
    %335 = vmatmul.mubr.bf16.gmra.mrb[0].mxu0 %v227
    %v336 = vpop.f32.mrb[0].mxu0
    %v337 = vadd.f32 %v86, %v336
    %v338 = vpop.f32.mrb[0].mxu0
    %v339 = vadd.f32 %v90, %v338
    %v340 = vpop.f32.mrb[0].mxu0
    %v341 = vadd.f32 %v86, %v340
    %v342 = vpop.f32.mrb[0].mxu0
    %v343 = vadd.f32 %v90, %v342
    %344 = vmatprep.mubr.bf16.mxu0 0
    %345 = vmatmul.mubr.bf16.gmra.mrb[0].mxu0 %v230
    %v346 = vpop.f32.mrb[0].mxu0
    %v347 = vadd.f32 %v86, %v346
    %v348 = vpop.f32.mrb[0].mxu0
    %v349 = vadd.f32 %v90, %v348
    %v350 = vpop.f32.mrb[0].mxu0
    %v351 = vadd.f32 %v86, %v350
    %v352 = vpop.f32.mrb[0].mxu0
    %v353 = vadd.f32 %v90, %v352
    %354 = vmatprep.mubr.bf16.mxu0 0
    %355 = vmatmul.mubr.bf16.gmra.mrb[0].mxu0 %v233
    %v356 = vpop.f32.mrb[0].mxu0
    %v357 = vadd.f32 %v86, %v356
    %v358 = vpop.f32.mrb[0].mxu0
    %v359 = vadd.f32 %v90, %v358
    %v360 = vpop.f32.mrb[0].mxu0
    %v361 = vadd.f32 %v86, %v360
    %v362 = vpop.f32.mrb[0].mxu0
    %v363 = vadd.f32 %v90, %v362
    %364 = vmatprep.mubr.bf16.mxu0 0
    %365 = vmatmul.mubr.bf16.gmra.mrb[0].mxu0 %v236
    %v366 = vpop.f32.mrb[0].mxu0
    %v367 = vadd.f32 %v86, %v366
    %v368 = vpop.f32.mrb[0].mxu0
    %v369 = vadd.f32 %v90, %v368
    %v370 = vpop.f32.mrb[0].mxu0
    %v371 = vadd.f32 %v86, %v370
    %v372 = vpop.f32.mrb[0].mxu0
    %v373 = vadd.f32 %v90, %v372
    %374 = vmatprep.mubr.bf16.mxu0 0
    %375 = vmatmul.mubr.bf16.gmra.mrb[0].mxu0 %v239
    %v376 = vpop.f32.mrb[0].mxu0
    %v377 = vadd.f32 %v86, %v376
    %v378 = vpop.f32.mrb[0].mxu0
    %v379 = vadd.f32 %v90, %v378
    %v380 = vpop.f32.mrb[0].mxu0
    %v381 = vadd.f32 %v86, %v380
    %v382 = vpop.f32.mrb[0].mxu0
    %v383 = vadd.f32 %v90, %v382
    %384 = vmatprep.mubr.bf16.mxu0 0
    %385 = vmatmul.mubr.bf16.gmra.mrb[0].mxu0 %v242
    %v386 = vpop.f32.mrb[0].mxu0
    %v387 = vadd.f32 %v86, %v386
    %v388 = vpop.f32.mrb[0].mxu0
    %v389 = vadd.f32 %v90, %v388
    %v390 = vpop.f32.mrb[0].mxu0
    %v391 = vadd.f32 %v86, %v390
    %v392 = vpop.f32.mrb[0].mxu0
    %v393 = vadd.f32 %v90, %v392
    %394 = vmatprep.mubr.bf16.mxu0 0
    %395 = vmatmul.mubr.bf16.gmra.mrb[0].mxu0 %v245
    %v396 = vpop.f32.mrb[0].mxu0
    %v397 = vadd.f32 %v86, %v396
    %v398 = vpop.f32.mrb[0].mxu0
    %v399 = vadd.f32 %v90, %v398
    %v400 = vpop.f32.mrb[0].mxu0
    %v401 = vadd.f32 %v86, %v400
    %v402 = vpop.f32.mrb[0].mxu0
    %v403 = vadd.f32 %v90, %v402
    %404 = vmatprep.mubr.bf16.mxu0 0
    %405 = vmatmul.mubr.bf16.gmra.mrb[0].mxu0 %v248
    %v406 = vpop.f32.mrb[0].mxu0
    %v407 = vadd.f32 %v86, %v406
    %v408 = vpop.f32.mrb[0].mxu0
    %v409 = vadd.f32 %v90, %v408
    %v410 = vpop.f32.mrb[0].mxu0
    %v411 = vadd.f32 %v86, %v410
    %v412 = vpop.f32.mrb[0].mxu0
    %v413 = vadd.f32 %v90, %v412
    %414 = vmatprep.mubr.bf16.mxu0 0
    %415 = vmatmul.mubr.bf16.gmra.mrb[0].mxu0 %v251
    %v416 = vpop.f32.mrb[0].mxu0
    %v417 = vadd.f32 %v86, %v416
    %v418 = vpop.f32.mrb[0].mxu0
    %v419 = vadd.f32 %v90, %v418
    %v420 = vpop.f32.mrb[0].mxu0
    %v421 = vadd.f32 %v86, %v420
    %v422 = vpop.f32.mrb[0].mxu0
    %v423 = vadd.f32 %v90, %v422
    %424 = vmatprep.mubr.bf16.mxu0 0
    %425 = vmatmul.mubr.bf16.gmra.mrb[0].mxu0 %v254
    %v426 = vpop.f32.mrb[0].mxu0
    %v427 = vadd.f32 %v86, %v426
    %v428 = vpop.f32.mrb[0].mxu0
    %v429 = vadd.f32 %v90, %v428
    %v430 = vpop.f32.mrb[0].mxu0
    %v431 = vadd.f32 %v86, %v430
    %v432 = vpop.f32.mrb[0].mxu0
    %v433 = vadd.f32 %v90, %v432
    %434 = vmatprep.mubr.bf16.mxu0 0
    %435 = vmatmul.mubr.bf16.gmra.mrb[0].mxu0 %v257
    %v436 = vpop.f32.mrb[0].mxu0
    %v437 = vadd.f32 %v86, %v436
    %v438 = vpop.f32.mrb[0].mxu0
    %v439 = vadd.f32 %v90, %v438
    %v440 = vpop.f32.mrb[0].mxu0
    %v441 = vadd.f32 %v86, %v440
    %v442 = vpop.f32.mrb[0].mxu0
    %v443 = vadd.f32 %v90, %v442
    %444 = vmatprep.mubr.bf16.mxu0 0
    %445 = vmatmul.mubr.bf16.gmra.mrb[0].mxu0 %v260
    %v446 = vpop.f32.mrb[0].mxu0
    %v447 = vadd.f32 %v86, %v446
    %v448 = vpop.f32.mrb[0].mxu0
    %v449 = vadd.f32 %v90, %v448
    %v450 = vpop.f32.mrb[0].mxu0
    %v451 = vadd.f32 %v86, %v450
    %v452 = vpop.f32.mrb[0].mxu0
    %v453 = vadd.f32 %v90, %v452
    %454 = vdwg.mxu0
    %v455 = vmax.f32 %v297, 0.0
    %v456 = vmax.f32 %v299, 0.0
    %v457 = vmax.f32 %v301, 0.0
    %v458 = vmax.f32 %v303, 0.0
    %v459 = vmax.f32 %v307, 0.0
    %v460 = vmax.f32 %v309, 0.0
    %v461 = vmax.f32 %v311, 0.0
    %v462 = vmax.f32 %v313, 0.0
    %v463 = vmax.f32 %v317, 0.0
    %v464 = vmax.f32 %v319, 0.0
    %v465 = vmax.f32 %v321, 0.0
    %v466 = vmax.f32 %v323, 0.0
    %v467 = vmax.f32 %v327, 0.0
    %v468 = vmax.f32 %v329, 0.0
    %v469 = vmax.f32 %v331, 0.0
    %v470 = vmax.f32 %v333, 0.0
    %v471 = vmax.f32 %v337, 0.0
    %v472 = vmax.f32 %v339, 0.0
    %v473 = vmax.f32 %v341, 0.0
    %v474 = vmax.f32 %v343, 0.0
    %v475 = vmax.f32 %v347, 0.0
    %v476 = vmax.f32 %v349, 0.0
    %v477 = vmax.f32 %v351, 0.0
    %v478 = vmax.f32 %v353, 0.0
    %v479 = vmax.f32 %v357, 0.0
    %v480 = vmax.f32 %v359, 0.0
    %v481 = vmax.f32 %v361, 0.0
    %v482 = vmax.f32 %v363, 0.0
    %v483 = vmax.f32 %v367, 0.0
    %v484 = vmax.f32 %v369, 0.0
    %v485 = vmax.f32 %v371, 0.0
    %v486 = vmax.f32 %v373, 0.0
    %v487 = vmax.f32 %v377, 0.0
    %v488 = vmax.f32 %v379, 0.0
    %v489 = vmax.f32 %v381, 0.0
    %v490 = vmax.f32 %v383, 0.0
    %v491 = vmax.f32 %v387, 0.0
    %v492 = vmax.f32 %v389, 0.0
    %v493 = vmax.f32 %v391, 0.0
    %v494 = vmax.f32 %v393, 0.0
    %v495 = vmax.f32 %v397, 0.0
    %v496 = vmax.f32 %v399, 0.0
    %v497 = vmax.f32 %v401, 0.0
    %v498 = vmax.f32 %v403, 0.0
    %v499 = vmax.f32 %v407, 0.0
    %v500 = vmax.f32 %v409, 0.0
    %v501 = vmax.f32 %v411, 0.0
    %v502 = vmax.f32 %v413, 0.0
    %v503 = vmax.f32 %v417, 0.0
    %v504 = vmax.f32 %v419, 0.0
    %v505 = vmax.f32 %v421, 0.0
    %v506 = vmax.f32 %v423, 0.0
    %v507 = vmax.f32 %v427, 0.0
    %v508 = vmax.f32 %v429, 0.0
    %v509 = vmax.f32 %v431, 0.0
    %v510 = vmax.f32 %v433, 0.0
    %v511 = vmax.f32 %v437, 0.0
    %v512 = vmax.f32 %v439, 0.0
    %v513 = vmax.f32 %v441, 0.0
    %v514 = vmax.f32 %v443, 0.0
    %v515 = vmax.f32 %v447, 0.0
    %v516 = vmax.f32 %v449, 0.0
    %v517 = vmax.f32 %v451, 0.0
    %v518 = vmax.f32 %v453, 0.0
    %v519 = vpack.c.bf16 %v457, %v455
    %v520 = vpack.c.bf16 %v458, %v456
    %v521 = vpack.c.bf16 %v461, %v459
    %v522 = vpack.c.bf16 %v462, %v460
    %v523 = vpack.c.bf16 %v465, %v463
    %v524 = vpack.c.bf16 %v466, %v464
    %v525 = vpack.c.bf16 %v469, %v467
    %v526 = vpack.c.bf16 %v470, %v468
    %v527 = vpack.c.bf16 %v473, %v471
    %v528 = vpack.c.bf16 %v474, %v472
    %v529 = vpack.c.bf16 %v477, %v475
    %v530 = vpack.c.bf16 %v478, %v476
    %v531 = vpack.c.bf16 %v481, %v479
    %v532 = vpack.c.bf16 %v482, %v480
    %v533 = vpack.c.bf16 %v485, %v483
    %v534 = vpack.c.bf16 %v486, %v484
    %v535 = vpack.c.bf16 %v489, %v487
    %v536 = vpack.c.bf16 %v490, %v488
    %v537 = vpack.c.bf16 %v493, %v491
    %v538 = vpack.c.bf16 %v494, %v492
    %v539 = vpack.c.bf16 %v497, %v495
    %v540 = vpack.c.bf16 %v498, %v496
    %v541 = vpack.c.bf16 %v501, %v499
    %v542 = vpack.c.bf16 %v502, %v500
    %v543 = vpack.c.bf16 %v505, %v503
    %v544 = vpack.c.bf16 %v506, %v504
    %v545 = vpack.c.bf16 %v509, %v507
    %v546 = vpack.c.bf16 %v510, %v508
    %v547 = vpack.c.bf16 %v513, %v511
    %v548 = vpack.c.bf16 %v514, %v512
    %v549 = vpack.c.bf16 %v517, %v515
    %v550 = vpack.c.bf16 %v518, %v516
    %v551 = vld [vmem:[#allocation2] sm:$0xff]
    %v552 = vld [vmem:[#allocation2 + $0x8] sm:$0xff]
    %v553 = vld [vmem:[#allocation2 + $0x10] sm:$0xff]
    %v554 = vld [vmem:[#allocation2 + $0x18] sm:$0xff]
    %v555 = vld [vmem:[#allocation2 + $0x20] sm:$0xff]
    %v556 = vld [vmem:[#allocation2 + $0x28] sm:$0xff]
    %v557 = vld [vmem:[#allocation2 + $0x30] sm:$0xff]
    %v558 = vld [vmem:[#allocation2 + $0x38] sm:$0xff]
    %v559 = vld [vmem:[#allocation2 + $0x40] sm:$0xff]
    %v560 = vld [vmem:[#allocation2 + $0x48] sm:$0xff]
    %v561 = vld [vmem:[#allocation2 + $0x50] sm:$0xff]
    %v562 = vld [vmem:[#allocation2 + $0x58] sm:$0xff]
    %v563 = vld [vmem:[#allocation2 + $0x60] sm:$0xff]
    %v564 = vld [vmem:[#allocation2 + $0x68] sm:$0xff]
    %v565 = vld [vmem:[#allocation2 + $0x70] sm:$0xff]
    %v566 = vld [vmem:[#allocation2 + $0x78] sm:$0xff]
    %v567 = vld [vmem:[#allocation2 + $0x80] sm:$0xff]
    %v568 = vld [vmem:[#allocation2 + $0x88] sm:$0xff]
    %v569 = vld [vmem:[#allocation2 + $0x90] sm:$0xff]
    %v570 = vld [vmem:[#allocation2 + $0x98] sm:$0xff]
    %v571 = vld [vmem:[#allocation2 + $0xa0] sm:$0xff]
    %v572 = vld [vmem:[#allocation2 + $0xa8] sm:$0xff]
    %v573 = vld [vmem:[#allocation2 + $0xb0] sm:$0xff]
    %v574 = vld [vmem:[#allocation2 + $0xb8] sm:$0xff]
    %v575 = vld [vmem:[#allocation2 + $0xc0] sm:$0xff]
    %v576 = vld [vmem:[#allocation2 + $0xc8] sm:$0xff]
    %v577 = vld [vmem:[#allocation2 + $0xd0] sm:$0xff]
    %v578 = vld [vmem:[#allocation2 + $0xd8] sm:$0xff]
    %v579 = vld [vmem:[#allocation2 + $0xe0] sm:$0xff]
    %v580 = vld [vmem:[#allocation2 + $0xe8] sm:$0xff]
    %v581 = vld [vmem:[#allocation2 + $0xf0] sm:$0xff]
    %v582 = vld [vmem:[#allocation2 + $0xf8] sm:$0xff]
    %v583 = vld [vmem:[%s4] sm:$0x3]
    %v585 = vlaneseq
    %v586 = vshrl.u32 %v585, 7
    %v587 = vsub.s32 0, %v586
    %v588 = vrot.slane %v583, %v587
    %v589 = vlaneseq
    %v590 = vshrl.u32 %v589, 7
    %v591 = vsub.s32 1, %v590
    %v592 = vrot.slane %v583, %v591
    %v627 = vunpack.c.l.b16 %v551
    %v628 = vunpack.c.h.b16 %v551
    %v629 = vunpack.c.l.b16 %v552
    %v630 = vunpack.c.h.b16 %v552
    %v631 = vunpack.c.l.b16 %v553
    %v632 = vunpack.c.h.b16 %v553
    %v633 = vunpack.c.l.b16 %v554
    %v634 = vunpack.c.h.b16 %v554
    %v635 = vunpack.c.l.b16 %v555
    %v636 = vunpack.c.h.b16 %v555
    %v637 = vunpack.c.l.b16 %v556
    %v638 = vunpack.c.h.b16 %v556
    %v639 = vunpack.c.l.b16 %v557
    %v640 = vunpack.c.h.b16 %v557
    %v641 = vunpack.c.l.b16 %v558
    %v642 = vunpack.c.h.b16 %v558
    %v643 = vunpack.c.l.b16 %v559
    %v644 = vunpack.c.h.b16 %v559
    %v645 = vunpack.c.l.b16 %v560
    %v646 = vunpack.c.h.b16 %v560
    %v647 = vunpack.c.l.b16 %v561
    %v648 = vunpack.c.h.b16 %v561
    %v649 = vunpack.c.l.b16 %v562
    %v650 = vunpack.c.h.b16 %v562
    %v651 = vunpack.c.l.b16 %v563
    %v652 = vunpack.c.h.b16 %v563
    %v653 = vunpack.c.l.b16 %v564
    %v654 = vunpack.c.h.b16 %v564
    %v655 = vunpack.c.l.b16 %v565
    %v656 = vunpack.c.h.b16 %v565
    %v657 = vunpack.c.l.b16 %v566
    %v658 = vunpack.c.h.b16 %v566
    %v659 = vunpack.c.l.b16 %v567
    %v660 = vunpack.c.h.b16 %v567
    %v661 = vunpack.c.l.b16 %v568
    %v662 = vunpack.c.h.b16 %v568
    %v663 = vunpack.c.l.b16 %v569
    %v664 = vunpack.c.h.b16 %v569
    %v665 = vunpack.c.l.b16 %v570
    %v666 = vunpack.c.h.b16 %v570
    %v667 = vunpack.c.l.b16 %v571
    %v668 = vunpack.c.h.b16 %v571
    %v669 = vunpack.c.l.b16 %v572
    %v670 = vunpack.c.h.b16 %v572
    %v671 = vunpack.c.l.b16 %v573
    %v672 = vunpack.c.h.b16 %v573
    %v673 = vunpack.c.l.b16 %v574
    %v674 = vunpack.c.h.b16 %v574
    %v675 = vunpack.c.l.b16 %v575
    %v676 = vunpack.c.h.b16 %v575
    %v677 = vunpack.c.l.b16 %v576
    %v678 = vunpack.c.h.b16 %v576
    %v679 = vunpack.c.l.b16 %v577
    %v680 = vunpack.c.h.b16 %v577
    %v681 = vunpack.c.l.b16 %v578
    %v682 = vunpack.c.h.b16 %v578
    %v683 = vunpack.c.l.b16 %v579
    %v684 = vunpack.c.h.b16 %v579
    %v685 = vunpack.c.l.b16 %v580
    %v686 = vunpack.c.h.b16 %v580
    %v687 = vunpack.c.l.b16 %v581
    %v688 = vunpack.c.h.b16 %v581
    %v689 = vunpack.c.l.b16 %v582
    %v690 = vunpack.c.h.b16 %v582
    %v691 = vpack.c.b16 %v629, %v627
    %v692 = vpack.c.b16 %v630, %v628
    %v693 = vpack.c.b16 %v633, %v631
    %v694 = vpack.c.b16 %v634, %v632
    %v695 = vpack.c.b16 %v637, %v635
    %v696 = vpack.c.b16 %v638, %v636
    %v697 = vpack.c.b16 %v641, %v639
    %v698 = vpack.c.b16 %v642, %v640
    %v699 = vpack.c.b16 %v645, %v643
    %v700 = vpack.c.b16 %v646, %v644
    %v701 = vpack.c.b16 %v649, %v647
    %v702 = vpack.c.b16 %v650, %v648
    %v703 = vpack.c.b16 %v653, %v651
    %v704 = vpack.c.b16 %v654, %v652
    %v705 = vpack.c.b16 %v657, %v655
    %v706 = vpack.c.b16 %v658, %v656
    %v707 = vpack.c.b16 %v661, %v659
    %v708 = vpack.c.b16 %v662, %v660
    %v709 = vpack.c.b16 %v665, %v663
    %v710 = vpack.c.b16 %v666, %v664
    %v711 = vpack.c.b16 %v669, %v667
    %v712 = vpack.c.b16 %v670, %v668
    %v713 = vpack.c.b16 %v673, %v671
    %v714 = vpack.c.b16 %v674, %v672
    %v715 = vpack.c.b16 %v677, %v675
    %v716 = vpack.c.b16 %v678, %v676
    %v717 = vpack.c.b16 %v681, %v679
    %v718 = vpack.c.b16 %v682, %v680
    %v719 = vpack.c.b16 %v685, %v683
    %v720 = vpack.c.b16 %v686, %v684
    %v721 = vpack.c.b16 %v689, %v687
    %v722 = vpack.c.b16 %v690, %v688
    %755 = vmatprep.subr.bf16.mxu0 %v692
    %756 = vmatpush1.bf16.msra.mxu0 %v691
    %757 = vmatprep.subr.bf16.mxu0 %v694
    %758 = vmatpush1.bf16.msra.mxu0 %v693
    %759 = vmatprep.subr.bf16.mxu0 %v696
    %760 = vmatpush1.bf16.msra.mxu0 %v695
    %761 = vmatprep.subr.bf16.mxu0 %v698
    %762 = vmatpush1.bf16.msra.mxu0 %v697
    %763 = vmatprep.subr.bf16.mxu0 %v700
    %764 = vmatpush1.bf16.msra.mxu0 %v699
    %765 = vmatprep.subr.bf16.mxu0 %v702
    %766 = vmatpush1.bf16.msra.mxu0 %v701
    %767 = vmatprep.subr.bf16.mxu0 %v704
    %768 = vmatpush1.bf16.msra.mxu0 %v703
    %769 = vmatprep.subr.bf16.mxu0 %v706
    %770 = vmatpush1.bf16.msra.mxu0 %v705
    %771 = vmatprep.subr.bf16.mxu0 %v708
    %772 = vmatpush1.bf16.msra.mxu0 %v707
    %773 = vmatprep.subr.bf16.mxu0 %v710
    %774 = vmatpush1.bf16.msra.mxu0 %v709
    %775 = vmatprep.subr.bf16.mxu0 %v712
    %776 = vmatpush1.bf16.msra.mxu0 %v711
    %777 = vmatprep.subr.bf16.mxu0 %v714
    %778 = vmatpush1.bf16.msra.mxu0 %v713
    %779 = vmatprep.subr.bf16.mxu0 %v716
    %780 = vmatpush1.bf16.msra.mxu0 %v715
    %781 = vmatprep.subr.bf16.mxu0 %v718
    %782 = vmatpush1.bf16.msra.mxu0 %v717
    %783 = vmatprep.subr.bf16.mxu0 %v720
    %784 = vmatpush1.bf16.msra.mxu0 %v719
    %785 = vmatprep.subr.bf16.mxu0 %v722
    %786 = vmatpush1.bf16.msra.mxu0 %v721
    %787 = vmatprep.mubr.bf16.mxu0 %v520
    %788 = vmatmul.mubr.bf16.gmra.mrb[0].mxu0 %v519
    %v789 = vpop.f32.mrb[0].mxu0
    %v790 = vadd.f32 %v588, %v789
    %v791 = vpop.f32.mrb[0].mxu0
    %v792 = vadd.f32 %v592, %v791
    %v793 = vpop.f32.mrb[0].mxu0
    %v794 = vadd.f32 %v588, %v793
    %v795 = vpop.f32.mrb[0].mxu0
    %v796 = vadd.f32 %v592, %v795
    %797 = vmatprep.mubr.bf16.mxu0 %v522
    %798 = vmatmul.mubr.bf16.gmra.mrb[0].mxu0 %v521
    %v799 = vpop.f32.mrb[0].mxu0
    %v800 = vadd.f32 %v588, %v799
    %v801 = vpop.f32.mrb[0].mxu0
    %v802 = vadd.f32 %v592, %v801
    %v803 = vpop.f32.mrb[0].mxu0
    %v804 = vadd.f32 %v588, %v803
    %v805 = vpop.f32.mrb[0].mxu0
    %v806 = vadd.f32 %v592, %v805
    %807 = vmatprep.mubr.bf16.mxu0 %v524
    %808 = vmatmul.mubr.bf16.gmra.mrb[0].mxu0 %v523
    %v809 = vpop.f32.mrb[0].mxu0
    %v810 = vadd.f32 %v588, %v809
    %v811 = vpop.f32.mrb[0].mxu0
    %v812 = vadd.f32 %v592, %v811
    %v813 = vpop.f32.mrb[0].mxu0
    %v814 = vadd.f32 %v588, %v813
    %v815 = vpop.f32.mrb[0].mxu0
    %v816 = vadd.f32 %v592, %v815
    %817 = vmatprep.mubr.bf16.mxu0 %v526
    %818 = vmatmul.mubr.bf16.gmra.mrb[0].mxu0 %v525
    %v819 = vpop.f32.mrb[0].mxu0
    %v820 = vadd.f32 %v588, %v819
    %v821 = vpop.f32.mrb[0].mxu0
    %v822 = vadd.f32 %v592, %v821
    %v823 = vpop.f32.mrb[0].mxu0
    %v824 = vadd.f32 %v588, %v823
    %v825 = vpop.f32.mrb[0].mxu0
    %v826 = vadd.f32 %v592, %v825
    %827 = vmatprep.mubr.bf16.mxu0 %v528
    %828 = vmatmul.mubr.bf16.gmra.mrb[0].mxu0 %v527
    %v829 = vpop.f32.mrb[0].mxu0
    %v830 = vadd.f32 %v588, %v829
    %v831 = vpop.f32.mrb[0].mxu0
    %v832 = vadd.f32 %v592, %v831
    %v833 = vpop.f32.mrb[0].mxu0
    %v834 = vadd.f32 %v588, %v833
    %v835 = vpop.f32.mrb[0].mxu0
    %v836 = vadd.f32 %v592, %v835
    %837 = vmatprep.mubr.bf16.mxu0 %v530
    %838 = vmatmul.mubr.bf16.gmra.mrb[0].mxu0 %v529
    %v839 = vpop.f32.mrb[0].mxu0
    %v840 = vadd.f32 %v588, %v839
    %v841 = vpop.f32.mrb[0].mxu0
    %v842 = vadd.f32 %v592, %v841
    %v843 = vpop.f32.mrb[0].mxu0
    %v844 = vadd.f32 %v588, %v843
    %v845 = vpop.f32.mrb[0].mxu0
    %v846 = vadd.f32 %v592, %v845
    %847 = vmatprep.mubr.bf16.mxu0 %v532
    %848 = vmatmul.mubr.bf16.gmra.mrb[0].mxu0 %v531
    %v849 = vpop.f32.mrb[0].mxu0
    %v850 = vadd.f32 %v588, %v849
    %v851 = vpop.f32.mrb[0].mxu0
    %v852 = vadd.f32 %v592, %v851
    %v853 = vpop.f32.mrb[0].mxu0
    %v854 = vadd.f32 %v588, %v853
    %v855 = vpop.f32.mrb[0].mxu0
    %v856 = vadd.f32 %v592, %v855
    %857 = vmatprep.mubr.bf16.mxu0 %v534
    %858 = vmatmul.mubr.bf16.gmra.mrb[0].mxu0 %v533
    %v859 = vpop.f32.mrb[0].mxu0
    %v860 = vadd.f32 %v588, %v859
    %v861 = vpop.f32.mrb[0].mxu0
    %v862 = vadd.f32 %v592, %v861
    %v863 = vpop.f32.mrb[0].mxu0
    %v864 = vadd.f32 %v588, %v863
    %v865 = vpop.f32.mrb[0].mxu0
    %v866 = vadd.f32 %v592, %v865
    %867 = vmatprep.mubr.bf16.mxu0 %v536
    %868 = vmatmul.mubr.bf16.gmra.mrb[0].mxu0 %v535
    %v869 = vpop.f32.mrb[0].mxu0
    %v870 = vadd.f32 %v588, %v869
    %v871 = vpop.f32.mrb[0].mxu0
    %v872 = vadd.f32 %v592, %v871
    %v873 = vpop.f32.mrb[0].mxu0
    %v874 = vadd.f32 %v588, %v873
    %v875 = vpop.f32.mrb[0].mxu0
    %v876 = vadd.f32 %v592, %v875
    %877 = vmatprep.mubr.bf16.mxu0 %v538
    %878 = vmatmul.mubr.bf16.gmra.mrb[0].mxu0 %v537
    %v879 = vpop.f32.mrb[0].mxu0
    %v880 = vadd.f32 %v588, %v879
    %v881 = vpop.f32.mrb[0].mxu0
    %v882 = vadd.f32 %v592, %v881
    %v883 = vpop.f32.mrb[0].mxu0
    %v884 = vadd.f32 %v588, %v883
    %v885 = vpop.f32.mrb[0].mxu0
    %v886 = vadd.f32 %v592, %v885
    %887 = vmatprep.mubr.bf16.mxu0 %v540
    %888 = vmatmul.mubr.bf16.gmra.mrb[0].mxu0 %v539
    %v889 = vpop.f32.mrb[0].mxu0
    %v890 = vadd.f32 %v588, %v889
    %v891 = vpop.f32.mrb[0].mxu0
    %v892 = vadd.f32 %v592, %v891
    %v893 = vpop.f32.mrb[0].mxu0
    %v894 = vadd.f32 %v588, %v893
    %v895 = vpop.f32.mrb[0].mxu0
    %v896 = vadd.f32 %v592, %v895
    %897 = vmatprep.mubr.bf16.mxu0 %v542
    %898 = vmatmul.mubr.bf16.gmra.mrb[0].mxu0 %v541
    %v899 = vpop.f32.mrb[0].mxu0
    %v900 = vadd.f32 %v588, %v899
    %v901 = vpop.f32.mrb[0].mxu0
    %v902 = vadd.f32 %v592, %v901
    %v903 = vpop.f32.mrb[0].mxu0
    %v904 = vadd.f32 %v588, %v903
    %v905 = vpop.f32.mrb[0].mxu0
    %v906 = vadd.f32 %v592, %v905
    %907 = vmatprep.mubr.bf16.mxu0 %v544
    %908 = vmatmul.mubr.bf16.gmra.mrb[0].mxu0 %v543
    %v909 = vpop.f32.mrb[0].mxu0
    %v910 = vadd.f32 %v588, %v909
    %v911 = vpop.f32.mrb[0].mxu0
    %v912 = vadd.f32 %v592, %v911
    %v913 = vpop.f32.mrb[0].mxu0
    %v914 = vadd.f32 %v588, %v913
    %v915 = vpop.f32.mrb[0].mxu0
    %v916 = vadd.f32 %v592, %v915
    %917 = vmatprep.mubr.bf16.mxu0 %v546
    %918 = vmatmul.mubr.bf16.gmra.mrb[0].mxu0 %v545
    %v919 = vpop.f32.mrb[0].mxu0
    %v920 = vadd.f32 %v588, %v919
    %v921 = vpop.f32.mrb[0].mxu0
    %v922 = vadd.f32 %v592, %v921
    %v923 = vpop.f32.mrb[0].mxu0
    %v924 = vadd.f32 %v588, %v923
    %v925 = vpop.f32.mrb[0].mxu0
    %v926 = vadd.f32 %v592, %v925
    %927 = vmatprep.mubr.bf16.mxu0 %v548
    %928 = vmatmul.mubr.bf16.gmra.mrb[0].mxu0 %v547
    %v929 = vpop.f32.mrb[0].mxu0
    %v930 = vadd.f32 %v588, %v929
    %v931 = vpop.f32.mrb[0].mxu0
    %v932 = vadd.f32 %v592, %v931
    %v933 = vpop.f32.mrb[0].mxu0
    %v934 = vadd.f32 %v588, %v933
    %v935 = vpop.f32.mrb[0].mxu0
    %v936 = vadd.f32 %v592, %v935
    %937 = vmatprep.mubr.bf16.mxu0 %v550
    %938 = vmatmul.mubr.bf16.gmra.mrb[0].mxu0 %v549
    %v939 = vpop.f32.mrb[0].mxu0
    %v940 = vadd.f32 %v588, %v939
    %v941 = vpop.f32.mrb[0].mxu0
    %v942 = vadd.f32 %v592, %v941
    %v943 = vpop.f32.mrb[0].mxu0
    %v944 = vadd.f32 %v588, %v943
    %v945 = vpop.f32.mrb[0].mxu0
    %v946 = vadd.f32 %v592, %v945
    %947 = vdwg.mxu0
    %v948 = vmax.f32 %v790, 0.0
    %v949 = vmax.f32 %v792, 0.0
    %v950 = vmax.f32 %v794, 0.0
    %v951 = vmax.f32 %v796, 0.0
    %v952 = vmax.f32 %v800, 0.0
    %v953 = vmax.f32 %v802, 0.0
    %v954 = vmax.f32 %v804, 0.0
    %v955 = vmax.f32 %v806, 0.0
    %v956 = vmax.f32 %v810, 0.0
    %v957 = vmax.f32 %v812, 0.0
    %v958 = vmax.f32 %v814, 0.0
    %v959 = vmax.f32 %v816, 0.0
    %v960 = vmax.f32 %v820, 0.0
    %v961 = vmax.f32 %v822, 0.0
    %v962 = vmax.f32 %v824, 0.0
    %v963 = vmax.f32 %v826, 0.0
    %v964 = vmax.f32 %v830, 0.0
    %v965 = vmax.f32 %v832, 0.0
    %v966 = vmax.f32 %v834, 0.0
    %v967 = vmax.f32 %v836, 0.0
    %v968 = vmax.f32 %v840, 0.0
    %v969 = vmax.f32 %v842, 0.0
    %v970 = vmax.f32 %v844, 0.0
    %v971 = vmax.f32 %v846, 0.0
    %v972 = vmax.f32 %v850, 0.0
    %v973 = vmax.f32 %v852, 0.0
    %v974 = vmax.f32 %v854, 0.0
    %v975 = vmax.f32 %v856, 0.0
    %v976 = vmax.f32 %v860, 0.0
    %v977 = vmax.f32 %v862, 0.0
    %v978 = vmax.f32 %v864, 0.0
    %v979 = vmax.f32 %v866, 0.0
    %v980 = vmax.f32 %v870, 0.0
    %v981 = vmax.f32 %v872, 0.0
    %v982 = vmax.f32 %v874, 0.0
    %v983 = vmax.f32 %v876, 0.0
    %v984 = vmax.f32 %v880, 0.0
    %v985 = vmax.f32 %v882, 0.0
    %v986 = vmax.f32 %v884, 0.0
    %v987 = vmax.f32 %v886, 0.0
    %v988 = vmax.f32 %v890, 0.0
    %v989 = vmax.f32 %v892, 0.0
    %v990 = vmax.f32 %v894, 0.0
    %v991 = vmax.f32 %v896, 0.0
    %v992 = vmax.f32 %v900, 0.0
    %v993 = vmax.f32 %v902, 0.0
    %v994 = vmax.f32 %v904, 0.0
    %v995 = vmax.f32 %v906, 0.0
    %v996 = vmax.f32 %v910, 0.0
    %v997 = vmax.f32 %v912, 0.0
    %v998 = vmax.f32 %v914, 0.0
    %v999 = vmax.f32 %v916, 0.0
    %v1000 = vmax.f32 %v920, 0.0
    %v1001 = vmax.f32 %v922, 0.0
    %v1002 = vmax.f32 %v924, 0.0
    %v1003 = vmax.f32 %v926, 0.0
    %v1004 = vmax.f32 %v930, 0.0
    %v1005 = vmax.f32 %v932, 0.0
    %v1006 = vmax.f32 %v934, 0.0
    %v1007 = vmax.f32 %v936, 0.0
    %v1008 = vmax.f32 %v940, 0.0
    %v1009 = vmax.f32 %v942, 0.0
    %v1010 = vmax.f32 %v944, 0.0
    %v1011 = vmax.f32 %v946, 0.0
    %v1012 = vpack.c.bf16 %v950, %v948
    %v1013 = vpack.c.bf16 %v951, %v949
    %v1014 = vpack.c.bf16 %v954, %v952
    %v1015 = vpack.c.bf16 %v955, %v953
    %v1016 = vpack.c.bf16 %v958, %v956
    %v1017 = vpack.c.bf16 %v959, %v957
    %v1018 = vpack.c.bf16 %v962, %v960
    %v1019 = vpack.c.bf16 %v963, %v961
    %v1020 = vpack.c.bf16 %v966, %v964
    %v1021 = vpack.c.bf16 %v967, %v965
    %v1022 = vpack.c.bf16 %v970, %v968
    %v1023 = vpack.c.bf16 %v971, %v969
    %v1024 = vpack.c.bf16 %v974, %v972
    %v1025 = vpack.c.bf16 %v975, %v973
    %v1026 = vpack.c.bf16 %v978, %v976
    %v1027 = vpack.c.bf16 %v979, %v977
    %v1028 = vpack.c.bf16 %v982, %v980
    %v1029 = vpack.c.bf16 %v983, %v981
    %v1030 = vpack.c.bf16 %v986, %v984
    %v1031 = vpack.c.bf16 %v987, %v985
    %v1032 = vpack.c.bf16 %v990, %v988
    %v1033 = vpack.c.bf16 %v991, %v989
    %v1034 = vpack.c.bf16 %v994, %v992
    %v1035 = vpack.c.bf16 %v995, %v993
    %v1036 = vpack.c.bf16 %v998, %v996
    %v1037 = vpack.c.bf16 %v999, %v997
    %v1038 = vpack.c.bf16 %v1002, %v1000
    %v1039 = vpack.c.bf16 %v1003, %v1001
    %v1040 = vpack.c.bf16 %v1006, %v1004
    %v1041 = vpack.c.bf16 %v1007, %v1005
    %v1042 = vpack.c.bf16 %v1010, %v1008
    %v1043 = vpack.c.bf16 %v1011, %v1009
    %v1044 = vld [vmem:[%s5] sm:$0xf]
    %v1045 = vld [vmem:[%s5 + $0x4] sm:$0xf]
    %v1046 = vld [vmem:[%s5 + $0x8] sm:$0xf]
    %v1047 = vld [vmem:[%s5 + $0xc] sm:$0xf]
    %v1048 = vld [vmem:[%s5 + $0x10] sm:$0xf]
    %v1049 = vld [vmem:[%s5 + $0x14] sm:$0xf]
    %v1050 = vld [vmem:[%s5 + $0x18] sm:$0xf]
    %v1051 = vld [vmem:[%s5 + $0x1c] sm:$0xf]
    %v1052 = vld [vmem:[%s5 + $0x20] sm:$0xf]
    %v1053 = vld [vmem:[%s5 + $0x24] sm:$0xf]
    %v1054 = vld [vmem:[%s5 + $0x28] sm:$0xf]
    %v1055 = vld [vmem:[%s5 + $0x2c] sm:$0xf]
    %v1056 = vld [vmem:[%s5 + $0x30] sm:$0xf]
    %v1057 = vld [vmem:[%s5 + $0x34] sm:$0xf]
    %v1058 = vld [vmem:[%s5 + $0x38] sm:$0xf]
    %v1059 = vld [vmem:[%s5 + $0x3c] sm:$0xf]
    %v1060 = vld [vmem:[%s5 + $0x40] sm:$0xf]
    %v1061 = vld [vmem:[%s5 + $0x44] sm:$0xf]
    %v1062 = vld [vmem:[%s5 + $0x48] sm:$0xf]
    %v1063 = vld [vmem:[%s5 + $0x4c] sm:$0xf]
    %v1064 = vld [vmem:[%s5 + $0x50] sm:$0xf]
    %v1065 = vld [vmem:[%s5 + $0x54] sm:$0xf]
    %v1066 = vld [vmem:[%s5 + $0x58] sm:$0xf]
    %v1067 = vld [vmem:[%s5 + $0x5c] sm:$0xf]
    %v1068 = vld [vmem:[%s5 + $0x60] sm:$0xf]
    %v1069 = vld [vmem:[%s5 + $0x64] sm:$0xf]
    %v1070 = vld [vmem:[%s5 + $0x68] sm:$0xf]
    %v1071 = vld [vmem:[%s5 + $0x6c] sm:$0xf]
    %v1072 = vld [vmem:[%s5 + $0x70] sm:$0xf]
    %v1073 = vld [vmem:[%s5 + $0x74] sm:$0xf]
    %v1074 = vld [vmem:[%s5 + $0x78] sm:$0xf]
    %v1075 = vld [vmem:[%s5 + $0x7c] sm:$0xf]
    %v1076 = vld [vmem:[%s6] sm:$0x1]
    %v1078 = vlaneseq
    %v1079 = vshrl.u32 %v1078, 7
    %v1080 = vsub.s32 0, %v1079
    %v1081 = vrot.slane %v1076, %v1080
    %v1115 = vunpack.c.l.b16 %v1044
    %v1116 = vunpack.c.l.b16 %v1045
    %v1117 = vunpack.c.l.b16 %v1046
    %v1118 = vunpack.c.l.b16 %v1047
    %v1119 = vunpack.c.l.b16 %v1048
    %v1120 = vunpack.c.l.b16 %v1049
    %v1121 = vunpack.c.l.b16 %v1050
    %v1122 = vunpack.c.l.b16 %v1051
    %v1123 = vunpack.c.l.b16 %v1052
    %v1124 = vunpack.c.l.b16 %v1053
    %v1125 = vunpack.c.l.b16 %v1054
    %v1126 = vunpack.c.l.b16 %v1055
    %v1127 = vunpack.c.l.b16 %v1056
    %v1128 = vunpack.c.l.b16 %v1057
    %v1129 = vunpack.c.l.b16 %v1058
    %v1130 = vunpack.c.l.b16 %v1059
    %v1131 = vunpack.c.l.b16 %v1060
    %v1132 = vunpack.c.l.b16 %v1061
    %v1133 = vunpack.c.l.b16 %v1062
    %v1134 = vunpack.c.l.b16 %v1063
    %v1135 = vunpack.c.l.b16 %v1064
    %v1136 = vunpack.c.l.b16 %v1065
    %v1137 = vunpack.c.l.b16 %v1066
    %v1138 = vunpack.c.l.b16 %v1067
    %v1139 = vunpack.c.l.b16 %v1068
    %v1140 = vunpack.c.l.b16 %v1069
    %v1141 = vunpack.c.l.b16 %v1070
    %v1142 = vunpack.c.l.b16 %v1071
    %v1143 = vunpack.c.l.b16 %v1072
    %v1144 = vunpack.c.l.b16 %v1073
    %v1145 = vunpack.c.l.b16 %v1074
    %v1146 = vunpack.c.l.b16 %v1075
    %v1147 = vpack.c.b16 %v1116, %v1115
    %v1148 = vpack.c.b16 %v1118, %v1117
    %v1149 = vpack.c.b16 %v1120, %v1119
    %v1150 = vpack.c.b16 %v1122, %v1121
    %v1151 = vpack.c.b16 %v1124, %v1123
    %v1152 = vpack.c.b16 %v1126, %v1125
    %v1153 = vpack.c.b16 %v1128, %v1127
    %v1154 = vpack.c.b16 %v1130, %v1129
    %v1155 = vpack.c.b16 %v1132, %v1131
    %v1156 = vpack.c.b16 %v1134, %v1133
    %v1157 = vpack.c.b16 %v1136, %v1135
    %v1158 = vpack.c.b16 %v1138, %v1137
    %v1159 = vpack.c.b16 %v1140, %v1139
    %v1160 = vpack.c.b16 %v1142, %v1141
    %v1161 = vpack.c.b16 %v1144, %v1143
    %v1162 = vpack.c.b16 %v1146, %v1145
    %1179 = vmatprep.subr.bf16.mxu0 0
    %1180 = vmatpush1.bf16.msra.mxu0 %v1147
    %1181 = vmatprep.subr.bf16.mxu0 0
    %1182 = vmatpush1.bf16.msra.mxu0 %v1148
    %1183 = vmatprep.subr.bf16.mxu0 0
    %1184 = vmatpush1.bf16.msra.mxu0 %v1149
    %1185 = vmatprep.subr.bf16.mxu0 0
    %1186 = vmatpush1.bf16.msra.mxu0 %v1150
    %1187 = vmatprep.subr.bf16.mxu0 0
    %1188 = vmatpush1.bf16.msra.mxu0 %v1151
    %1189 = vmatprep.subr.bf16.mxu0 0
    %1190 = vmatpush1.bf16.msra.mxu0 %v1152
    %1191 = vmatprep.subr.bf16.mxu0 0
    %1192 = vmatpush1.bf16.msra.mxu0 %v1153
    %1193 = vmatprep.subr.bf16.mxu0 0
    %1194 = vmatpush1.bf16.msra.mxu0 %v1154
    %1195 = vmatprep.subr.bf16.mxu0 0
    %1196 = vmatpush1.bf16.msra.mxu0 %v1155
    %1197 = vmatprep.subr.bf16.mxu0 0
    %1198 = vmatpush1.bf16.msra.mxu0 %v1156
    %1199 = vmatprep.subr.bf16.mxu0 0
    %1200 = vmatpush1.bf16.msra.mxu0 %v1157
    %1201 = vmatprep.subr.bf16.mxu0 0
    %1202 = vmatpush1.bf16.msra.mxu0 %v1158
    %1203 = vmatprep.subr.bf16.mxu0 0
    %1204 = vmatpush1.bf16.msra.mxu0 %v1159
    %1205 = vmatprep.subr.bf16.mxu0 0
    %1206 = vmatpush1.bf16.msra.mxu0 %v1160
    %1207 = vmatprep.subr.bf16.mxu0 0
    %1208 = vmatpush1.bf16.msra.mxu0 %v1161
    %1209 = vmatprep.subr.bf16.mxu0 0
    %1210 = vmatpush1.bf16.msra.mxu0 %v1162
    %1211 = vmatprep.mubr.bf16.mxu0 %v1013
    %1212 = vmatmul.mubr.bf16.gmra.mrb[0].mxu0 %v1012
    %v1213 = vpop.f32.mrb[0].mxu0
    %v1214 = vadd.f32 %v1081, %v1213
    %v1215 = vpop.f32.mrb[0].mxu0
    %v1216 = vpop.f32.mrb[0].mxu0
    %v1217 = vadd.f32 %v1081, %v1216
    %v1218 = vpop.f32.mrb[0].mxu0
    %1219 = vmatprep.mubr.bf16.mxu0 %v1015
    %1220 = vmatmul.mubr.bf16.gmra.mrb[0].mxu0 %v1014
    %v1221 = vpop.f32.mrb[0].mxu0
    %v1222 = vadd.f32 %v1081, %v1221
    %v1223 = vpop.f32.mrb[0].mxu0
    %v1224 = vpop.f32.mrb[0].mxu0
    %v1225 = vadd.f32 %v1081, %v1224
    %v1226 = vpop.f32.mrb[0].mxu0
    %1227 = vmatprep.mubr.bf16.mxu0 %v1017
    %1228 = vmatmul.mubr.bf16.gmra.mrb[0].mxu0 %v1016
    %v1229 = vpop.f32.mrb[0].mxu0
    %v1230 = vadd.f32 %v1081, %v1229
    %v1231 = vpop.f32.mrb[0].mxu0
    %v1232 = vpop.f32.mrb[0].mxu0
    %v1233 = vadd.f32 %v1081, %v1232
    %v1234 = vpop.f32.mrb[0].mxu0
    %1235 = vmatprep.mubr.bf16.mxu0 %v1019
    %1236 = vmatmul.mubr.bf16.gmra.mrb[0].mxu0 %v1018
    %v1237 = vpop.f32.mrb[0].mxu0
    %v1238 = vadd.f32 %v1081, %v1237
    %v1239 = vpop.f32.mrb[0].mxu0
    %v1240 = vpop.f32.mrb[0].mxu0
    %v1241 = vadd.f32 %v1081, %v1240
    %v1242 = vpop.f32.mrb[0].mxu0
    %1243 = vmatprep.mubr.bf16.mxu0 %v1021
    %1244 = vmatmul.mubr.bf16.gmra.mrb[0].mxu0 %v1020
    %v1245 = vpop.f32.mrb[0].mxu0
    %v1246 = vadd.f32 %v1081, %v1245
    %v1247 = vpop.f32.mrb[0].mxu0
    %v1248 = vpop.f32.mrb[0].mxu0
    %v1249 = vadd.f32 %v1081, %v1248
    %v1250 = vpop.f32.mrb[0].mxu0
    %1251 = vmatprep.mubr.bf16.mxu0 %v1023
    %1252 = vmatmul.mubr.bf16.gmra.mrb[0].mxu0 %v1022
    %v1253 = vpop.f32.mrb[0].mxu0
    %v1254 = vadd.f32 %v1081, %v1253
    %v1255 = vpop.f32.mrb[0].mxu0
    %v1256 = vpop.f32.mrb[0].mxu0
    %v1257 = vadd.f32 %v1081, %v1256
    %v1258 = vpop.f32.mrb[0].mxu0
    %1259 = vmatprep.mubr.bf16.mxu0 %v1025
    %1260 = vmatmul.mubr.bf16.gmra.mrb[0].mxu0 %v1024
    %v1261 = vpop.f32.mrb[0].mxu0
    %v1262 = vadd.f32 %v1081, %v1261
    %v1263 = vpop.f32.mrb[0].mxu0
    %v1264 = vpop.f32.mrb[0].mxu0
    %v1265 = vadd.f32 %v1081, %v1264
    %v1266 = vpop.f32.mrb[0].mxu0
    %1267 = vmatprep.mubr.bf16.mxu0 %v1027
    %1268 = vmatmul.mubr.bf16.gmra.mrb[0].mxu0 %v1026
    %v1269 = vpop.f32.mrb[0].mxu0
    %v1270 = vadd.f32 %v1081, %v1269
    %v1271 = vpop.f32.mrb[0].mxu0
    %v1272 = vpop.f32.mrb[0].mxu0
    %v1273 = vadd.f32 %v1081, %v1272
    %v1274 = vpop.f32.mrb[0].mxu0
    %1275 = vmatprep.mubr.bf16.mxu0 %v1029
    %1276 = vmatmul.mubr.bf16.gmra.mrb[0].mxu0 %v1028
    %v1277 = vpop.f32.mrb[0].mxu0
    %v1278 = vadd.f32 %v1081, %v1277
    %v1279 = vpop.f32.mrb[0].mxu0
    %v1280 = vpop.f32.mrb[0].mxu0
    %v1281 = vadd.f32 %v1081, %v1280
    %v1282 = vpop.f32.mrb[0].mxu0
    %1283 = vmatprep.mubr.bf16.mxu0 %v1031
    %1284 = vmatmul.mubr.bf16.gmra.mrb[0].mxu0 %v1030
    %v1285 = vpop.f32.mrb[0].mxu0
    %v1286 = vadd.f32 %v1081, %v1285
    %v1287 = vpop.f32.mrb[0].mxu0
    %v1288 = vpop.f32.mrb[0].mxu0
    %v1289 = vadd.f32 %v1081, %v1288
    %v1290 = vpop.f32.mrb[0].mxu0
    %1291 = vmatprep.mubr.bf16.mxu0 %v1033
    %1292 = vmatmul.mubr.bf16.gmra.mrb[0].mxu0 %v1032
    %v1293 = vpop.f32.mrb[0].mxu0
    %v1294 = vadd.f32 %v1081, %v1293
    %v1295 = vpop.f32.mrb[0].mxu0
    %v1296 = vpop.f32.mrb[0].mxu0
    %v1297 = vadd.f32 %v1081, %v1296
    %v1298 = vpop.f32.mrb[0].mxu0
    %1299 = vmatprep.mubr.bf16.mxu0 %v1035
    %1300 = vmatmul.mubr.bf16.gmra.mrb[0].mxu0 %v1034
    %v1301 = vpop.f32.mrb[0].mxu0
    %v1302 = vadd.f32 %v1081, %v1301
    %v1303 = vpop.f32.mrb[0].mxu0
    %v1304 = vpop.f32.mrb[0].mxu0
    %v1305 = vadd.f32 %v1081, %v1304
    %v1306 = vpop.f32.mrb[0].mxu0
    %1307 = vmatprep.mubr.bf16.mxu0 %v1037
    %1308 = vmatmul.mubr.bf16.gmra.mrb[0].mxu0 %v1036
    %v1309 = vpop.f32.mrb[0].mxu0
    %v1310 = vadd.f32 %v1081, %v1309
    %v1311 = vpop.f32.mrb[0].mxu0
    %v1312 = vpop.f32.mrb[0].mxu0
    %v1313 = vadd.f32 %v1081, %v1312
    %v1314 = vpop.f32.mrb[0].mxu0
    %1315 = vmatprep.mubr.bf16.mxu0 %v1039
    %1316 = vmatmul.mubr.bf16.gmra.mrb[0].mxu0 %v1038
    %v1317 = vpop.f32.mrb[0].mxu0
    %v1318 = vadd.f32 %v1081, %v1317
    %v1319 = vpop.f32.mrb[0].mxu0
    %v1320 = vpop.f32.mrb[0].mxu0
    %v1321 = vadd.f32 %v1081, %v1320
    %v1322 = vpop.f32.mrb[0].mxu0
    %1323 = vmatprep.mubr.bf16.mxu0 %v1041
    %1324 = vmatmul.mubr.bf16.gmra.mrb[0].mxu0 %v1040
    %v1325 = vpop.f32.mrb[0].mxu0
    %v1326 = vadd.f32 %v1081, %v1325
    %v1327 = vpop.f32.mrb[0].mxu0
    %v1328 = vpop.f32.mrb[0].mxu0
    %v1329 = vadd.f32 %v1081, %v1328
    %v1330 = vpop.f32.mrb[0].mxu0
    %1331 = vmatprep.mubr.bf16.mxu0 %v1043
    %1332 = vmatmul.mubr.bf16.gmra.mrb[0].mxu0 %v1042
    %v1333 = vpop.f32.mrb[0].mxu0
    %v1334 = vadd.f32 %v1081, %v1333
    %v1335 = vpop.f32.mrb[0].mxu0
    %v1336 = vpop.f32.mrb[0].mxu0
    %v1337 = vadd.f32 %v1081, %v1336
    %v1338 = vpop.f32.mrb[0].mxu0
    %1339 = vdwg.mxu0
    %v1340 = vpack.c.bf16 %v1217, %v1214
    %v1341 = vpack.c.bf16 %v1225, %v1222
    %v1342 = vpack.c.bf16 %v1233, %v1230
    %v1343 = vpack.c.bf16 %v1241, %v1238
    %v1344 = vpack.c.bf16 %v1249, %v1246
    %v1345 = vpack.c.bf16 %v1257, %v1254
    %v1346 = vpack.c.bf16 %v1265, %v1262
    %v1347 = vpack.c.bf16 %v1273, %v1270
    %v1348 = vpack.c.bf16 %v1281, %v1278
    %v1349 = vpack.c.bf16 %v1289, %v1286
    %v1350 = vpack.c.bf16 %v1297, %v1294
    %v1351 = vpack.c.bf16 %v1305, %v1302
    %v1352 = vpack.c.bf16 %v1313, %v1310
    %v1353 = vpack.c.bf16 %v1321, %v1318
    %v1354 = vpack.c.bf16 %v1329, %v1326
    %v1355 = vpack.c.bf16 %v1337, %v1334
    %v1372 = vunpack.c.l.b16 %v1340
    %v1373 = vunpack.c.h.b16 %v1340
    %v1374 = vunpack.c.l.b16 %v1341
    %v1375 = vunpack.c.h.b16 %v1341
    %v1376 = vunpack.c.l.b16 %v1342
    %v1377 = vunpack.c.h.b16 %v1342
    %v1378 = vunpack.c.l.b16 %v1343
    %v1379 = vunpack.c.h.b16 %v1343
    %v1380 = vunpack.c.l.b16 %v1344
    %v1381 = vunpack.c.h.b16 %v1344
    %v1382 = vunpack.c.l.b16 %v1345
    %v1383 = vunpack.c.h.b16 %v1345
    %v1384 = vunpack.c.l.b16 %v1346
    %v1385 = vunpack.c.h.b16 %v1346
    %v1386 = vunpack.c.l.b16 %v1347
    %v1387 = vunpack.c.h.b16 %v1347
    %v1388 = vunpack.c.l.b16 %v1348
    %v1389 = vunpack.c.h.b16 %v1348
    %v1390 = vunpack.c.l.b16 %v1349
    %v1391 = vunpack.c.h.b16 %v1349
    %v1392 = vunpack.c.l.b16 %v1350
    %v1393 = vunpack.c.h.b16 %v1350
    %v1394 = vunpack.c.l.b16 %v1351
    %v1395 = vunpack.c.h.b16 %v1351
    %v1396 = vunpack.c.l.b16 %v1352
    %v1397 = vunpack.c.h.b16 %v1352
    %v1398 = vunpack.c.l.b16 %v1353
    %v1399 = vunpack.c.h.b16 %v1353
    %v1400 = vunpack.c.l.b16 %v1354
    %v1401 = vunpack.c.h.b16 %v1354
    %v1402 = vunpack.c.l.b16 %v1355
    %v1403 = vunpack.c.h.b16 %v1355
    %v1404 = vpack.c.b16 %v1372, %v1372
    %v1405 = vpack.c.b16 %v1373, %v1373
    %v1406 = vpack.c.b16 %v1374, %v1374
    %v1407 = vpack.c.b16 %v1375, %v1375
    %v1408 = vpack.c.b16 %v1376, %v1376
    %v1409 = vpack.c.b16 %v1377, %v1377
    %v1410 = vpack.c.b16 %v1378, %v1378
    %v1411 = vpack.c.b16 %v1379, %v1379
    %v1412 = vpack.c.b16 %v1380, %v1380
    %v1413 = vpack.c.b16 %v1381, %v1381
    %v1414 = vpack.c.b16 %v1382, %v1382
    %v1415 = vpack.c.b16 %v1383, %v1383
    %v1416 = vpack.c.b16 %v1384, %v1384
    %v1417 = vpack.c.b16 %v1385, %v1385
    %v1418 = vpack.c.b16 %v1386, %v1386
    %v1419 = vpack.c.b16 %v1387, %v1387
    %v1420 = vpack.c.b16 %v1388, %v1388
    %v1421 = vpack.c.b16 %v1389, %v1389
    %v1422 = vpack.c.b16 %v1390, %v1390
    %v1423 = vpack.c.b16 %v1391, %v1391
    %v1424 = vpack.c.b16 %v1392, %v1392
    %v1425 = vpack.c.b16 %v1393, %v1393
    %v1426 = vpack.c.b16 %v1394, %v1394
    %v1427 = vpack.c.b16 %v1395, %v1395
    %v1428 = vpack.c.b16 %v1396, %v1396
    %v1429 = vpack.c.b16 %v1397, %v1397
    %v1430 = vpack.c.b16 %v1398, %v1398
    %v1431 = vpack.c.b16 %v1399, %v1399
    %v1432 = vpack.c.b16 %v1400, %v1400
    %v1433 = vpack.c.b16 %v1401, %v1401
    %v1434 = vpack.c.b16 %v1402, %v1402
    %v1435 = vpack.c.b16 %v1403, %v1403
    %1468 = vst [vmem:[%s7] sm:$0xf] %v1404
    %1469 = vst [vmem:[%s7 + $0x4] sm:$0xf] %v1405
    %1470 = vst [vmem:[%s7 + $0x8] sm:$0xf] %v1406
    %1471 = vst [vmem:[%s7 + $0xc] sm:$0xf] %v1407
    %1472 = vst [vmem:[%s7 + $0x10] sm:$0xf] %v1408
    %1473 = vst [vmem:[%s7 + $0x14] sm:$0xf] %v1409
    %1474 = vst [vmem:[%s7 + $0x18] sm:$0xf] %v1410
    %1475 = vst [vmem:[%s7 + $0x1c] sm:$0xf] %v1411
    %1476 = vst [vmem:[%s7 + $0x20] sm:$0xf] %v1412
    %1477 = vst [vmem:[%s7 + $0x24] sm:$0xf] %v1413
    %1478 = vst [vmem:[%s7 + $0x28] sm:$0xf] %v1414
    %1479 = vst [vmem:[%s7 + $0x2c] sm:$0xf] %v1415
    %1480 = vst [vmem:[%s7 + $0x30] sm:$0xf] %v1416
    %1481 = vst [vmem:[%s7 + $0x34] sm:$0xf] %v1417
    %1482 = vst [vmem:[%s7 + $0x38] sm:$0xf] %v1418
    %1483 = vst [vmem:[%s7 + $0x3c] sm:$0xf] %v1419
    %1484 = vst [vmem:[%s7 + $0x40] sm:$0xf] %v1420
    %1485 = vst [vmem:[%s7 + $0x44] sm:$0xf] %v1421
    %1486 = vst [vmem:[%s7 + $0x48] sm:$0xf] %v1422
    %1487 = vst [vmem:[%s7 + $0x4c] sm:$0xf] %v1423
    %1488 = vst [vmem:[%s7 + $0x50] sm:$0xf] %v1424
    %1489 = vst [vmem:[%s7 + $0x54] sm:$0xf] %v1425
    %1490 = vst [vmem:[%s7 + $0x58] sm:$0xf] %v1426
    %1491 = vst [vmem:[%s7 + $0x5c] sm:$0xf] %v1427
    %1492 = vst [vmem:[%s7 + $0x60] sm:$0xf] %v1428
    %1493 = vst [vmem:[%s7 + $0x64] sm:$0xf] %v1429
    %1494 = vst [vmem:[%s7 + $0x68] sm:$0xf] %v1430
    %1495 = vst [vmem:[%s7 + $0x6c] sm:$0xf] %v1431
    %1496 = vst [vmem:[%s7 + $0x70] sm:$0xf] %v1432
    %1497 = vst [vmem:[%s7 + $0x74] sm:$0xf] %v1433
    %1498 = vst [vmem:[%s7 + $0x78] sm:$0xf] %v1434
    %1499 = vst [vmem:[%s7 + $0x7c] sm:$0xf] %v1435
    // Predicated region
    $region34: #{mysac_lazy_q_forward.1} parent=1 // pred_check
      _
    $region35: #{mysac_lazy_q_forward.1} parent=1 // pred_check_branch
      %1501 = sbr.rel (0) target = $region37
    $region36: #{mysac_lazy_q_forward.1} parent=1 // pred_region
      _
    $region37: #{mysac_lazy_q_forward.1} parent=1 // pred_fallthru
      _
    // Predicated region
    $region38: #{mysac_lazy_q_forward.1} parent=1 // pred_check
      _
    $region39: #{mysac_lazy_q_forward.1} parent=1 // pred_check_branch
      %1503 = sbr.rel (0) target = $region41
    $region40: #{mysac_lazy_q_forward.1} parent=1 // pred_region
      _
    $region41: #{mysac_lazy_q_forward.1} parent=1 // pred_fallthru
      _
    %1504 = vsyncpa [#allocation3], 1

</llo_original>
